<compile_context>
chip_gen: v6e
topology: v6e:2x2x1
jax: 0.10.0
libtpu: 0.0.40
codegen_flags: <defaults>
</compile_context>

<pallas_src>
import math

import jax
import jax.numpy as jnp
from jax import lax
from jax.experimental import pallas as pl
from jax.experimental.pallas import tpu as pltpu

LANES = 128          # vreg lane width
CHUNK_ROWS = 32      # rows per inner-loop step (= accumulator height, 4 f32 vregs)
_LOG2 = math.log(2.0)


def _max_tile_rows() -> int:
    """Block-height cap. 4096 rows (2 MiB f32/input/buffer, 8 MiB double-buffered)
    fits every generation's default scoped VMEM; v7x gets 8192 because its
    faster HBM makes the fixed per-grid-step overhead relatively larger."""
    try:
        kind = jax.devices()[0].device_kind.lower()
    except Exception:  # defensive: never let detection break the kernel
        kind = ""
    return 8192 if "v7" in kind else 4096


def _stable_logcosh(d):
    # log(cosh(d)) = |d| + log(1 + exp(-2|d|)) - log(2)
    a = jnp.abs(d)
    return a + jnp.log(1.0 + jnp.exp(-2.0 * a)) - jnp.float32(_LOG2)


def _make_logcosh_kernel(num_splits, num_blocks, chunk_rows, n_chunks):
    loop_unroll = min(2, n_chunks)

    def kernel(yt_ref, yp_ref, o_ref, acc_ref):
        c = pl.program_id(0)   # split axis ("parallel")
        i = pl.program_id(1)   # step within split ("arbitrary", reduction)

        @pl.when(i == 0)
        def _init():
            acc_ref[...] = jnp.zeros_like(acc_ref)

        # Interleaved block ownership: split c handles blocks c, c+S, c+2S, ...
        # The last step of a split can be a duplicate (clamped) block when
        # num_blocks % num_splits != 0; its accumulation is skipped.
        @pl.when(i * num_splits + c < num_blocks)
        def _accumulate():
            def body(j, carry):
                r = pl.multiple_of(j * chunk_rows, chunk_rows)
                d = (yp_ref[pl.ds(r, chunk_rows), :].astype(jnp.float32)
                     - yt_ref[pl.ds(r, chunk_rows), :].astype(jnp.float32))
                # Pure VPU/EUP work on a few vregs; acc stays in VMEM/vregs.
                acc_ref[...] += _stable_logcosh(d)
                return carry

            lax.fori_loop(0, n_chunks, body, None, unroll=loop_unroll)

        @pl.when(i == pl.num_programs(1) - 1)
        def _finalize():
            o_ref[0, 0] = jnp.sum(acc_ref[...])   # single XLU reduce per split

    return kernel


def log_cosh_loss(y_true: jax.Array, y_pred: jax.Array) -> jax.Array:
    """Pallas TPU implementation of torch.mean(torch.log(torch.cosh(y_pred - y_true)))."""
    assert y_true.shape == y_pred.shape, "y_true / y_pred must have the same shape"
    n = y_true.size
    yt = y_true.reshape(-1)
    yp = y_pred.reshape(-1)

    rows = n // LANES
    if rows < 8:
        # Tiny input (< 1024 elements): a kernel launch is not worth it.
        d = yp.astype(jnp.float32) - yt.astype(jnp.float32)
        return jnp.sum(_stable_logcosh(d)) / jnp.float32(n)

    # ---- tiling -------------------------------------------------------------
    max_tile = _max_tile_rows()
    if rows >= CHUNK_ROWS:
        nb_target = -(-rows // max_tile)                                   # cdiv
        tile_rows = max(CHUNK_ROWS,
                        ((rows // nb_target) // CHUNK_ROWS) * CHUNK_ROWS)  # mult of 32
        tile_rows = min(tile_rows, max_tile)
        chunk_rows = CHUNK_ROWS
    else:
        tile_rows = (rows // 8) * 8        # single small block, one chunk
        chunk_rows = tile_rows
    n_chunks = tile_rows // chunk_rows
    num_blocks = rows // tile_rows

    # Two partial sums -> both TensorCores on v7x; skipped for few-block inputs
    # where the split only adds init/finalize + pipeline warm-up on 1-TC chips.
    num_splits = 2 if num_blocks >= 4 else 1
    steps_per_split = -(-num_blocks // num_splits)                         # cdiv

    covered_rows = num_blocks * tile_rows
    covered_elems = covered_rows * LANES

    # ---- lane-aligned slab (zero-copy when n % 128 == 0) --------------------
    if n % LANES == 0:
        yt2 = yt.reshape(rows, LANES)
        yp2 = yp.reshape(rows, LANES)
    else:
        # TODO(synk): for non-lane-aligned n this prefix slice materializes a
        # copy; in-kernel masking of the final partial row would avoid it.
        lane_elems = rows * LANES
        yt2 = yt[:lane_elems].reshape(rows, LANES)
        yp2 = yp[:lane_elems].reshape(rows, LANES)

    def block_map(c, i):
        # Clamp so the (possibly skipped) final step of a split never DMAs OOB.
        return (jnp.minimum(i * num_splits + c, num_blocks - 1), 0)

    kernel = _make_logcosh_kernel(num_splits, num_blocks, chunk_rows, n_chunks)

    partial = pl.pallas_call(
        kernel,
        out_shape=jax.ShapeDtypeStruct((num_splits, 1), jnp.float32),
        grid_spec=pltpu.PrefetchScalarGridSpec(
            num_scalar_prefetch=0,
            grid=(num_splits, steps_per_split),
            in_specs=[
                pl.BlockSpec((tile_rows, LANES), block_map),
                pl.BlockSpec((tile_rows, LANES), block_map),
            ],
            out_specs=pl.BlockSpec((1, 1), lambda c, i: (c, 0),
                                   memory_space=pltpu.SMEM),
            scratch_shapes=[pltpu.VMEM((chunk_rows, LANES), jnp.float32)],
        ),
        compiler_params=pltpu.CompilerParams(
            dimension_semantics=("parallel", "arbitrary"),
            vmem_limit_bytes=32 * 1024 * 1024,
        ),
    )(yt2, yp2)

    total = jnp.sum(partial)

    # Ragged tail: leftover rows (< one block) plus the sub-128-lane remainder.
    if covered_elems < n:
        tail_t = yt[covered_elems:].astype(jnp.float32)
        tail_p = yp[covered_elems:].astype(jnp.float32)
        total = total + jnp.sum(_stable_logcosh(tail_p - tail_t))

    return total / jnp.float32(n)


def _reference(y_true, y_pred):
    return jnp.mean(jnp.log(jnp.cosh(y_pred.astype(jnp.float32)
                                     - y_true.astype(jnp.float32))))


if __name__ == "__main__":
    key = jax.random.PRNGKey(0)

    # Primary check: small NCHW-style loss inputs (lane-aligned, single block).
    k1, k2, k3, k4 = jax.random.split(key, 4)
    shape = (2, 4, 16, 16)
    y_true = jax.random.normal(k1, shape, dtype=jnp.float32)
    y_pred = jax.random.normal(k2, shape, dtype=jnp.float32)
    loss = log_cosh_loss(y_true, y_pred)
    jax.block_until_ready(loss)
    ref = _reference(y_true, y_pred)
    assert jnp.allclose(loss, ref, atol=1e-5, rtol=1e-5), (loss, ref)

    # Secondary check: non-lane-aligned size exercising the chunk loop + tail.
    shape2 = (3, 5, 37, 29)
    y_true2 = jax.random.normal(k3, shape2, dtype=jnp.float32)
    y_pred2 = jax.random.normal(k4, shape2, dtype=jnp.float32)
    loss2 = log_cosh_loss(y_true2, y_pred2)
    jax.block_until_ready(loss2)
    ref2 = _reference(y_true2, y_pred2)
    assert jnp.allclose(loss2, ref2, atol=1e-5, rtol=1e-5), (loss2, ref2)

    print("KERNEL_OK")
</pallas_src>

<mosaic_0001>
module attributes {stable_mosaic.version = 11 : i64} {
  func.func @kernel(%arg0: i32, %arg1: i32, %arg2: memref<16x128xf32, #tpu.memory_space<vmem>>, %arg3: memref<16x128xf32, #tpu.memory_space<vmem>>, %arg4: memref<1x1xf32, #tpu.memory_space<smem>>, %arg5: memref<16x128xf32, #tpu.memory_space<vmem>>) attributes {dimension_semantics = [#tpu.dimension_semantics<parallel>, #tpu.dimension_semantics<arbitrary>], iteration_bounds = array<i64: 1, 1>, scalar_prefetch = 0 : i64, scratch_operands = 1 : i64, tpu.core_type = #tpu.core_type<tc>, window_params = [{transform_indices = @transform_0, window_bounds = array<i64: 16, 128>}, {transform_indices = @transform_1, window_bounds = array<i64: 16, 128>}, {transform_indices = @transform_2, window_bounds = array<i64: 1, 1>}]} {
    %c0_i32 = arith.constant 0 : i32
    %0 = arith.cmpi eq, %arg1, %c0_i32 : i32
    %1 = arith.extui %0 : i1 to i32
    %c0_i32_0 = arith.constant 0 : i32
    %2 = arith.cmpi ne, %1, %c0_i32_0 : i32
    scf.if %2 {
      %cst = arith.constant 0.000000e+00 : f32
      %11 = vector.broadcast %cst : f32 to vector<16x128xf32>
      %c0 = arith.constant 0 : index
      %c0_5 = arith.constant 0 : index
      %12 = vector.load %arg5[%c0, %c0_5] : memref<16x128xf32, #tpu.memory_space<vmem>>, vector<16x128xf32>
      tpu.vector_store %arg5[%c0, %c0_5], %11 {strides = array<i32>} : memref<16x128xf32, #tpu.memory_space<vmem>>, vector<16x128xf32>,
    } else {
    }
    %c1_i32 = arith.constant 1 : i32
    %3 = arith.muli %arg1, %c1_i32 : i32
    %4 = arith.addi %3, %arg0 : i32
    %c1_i32_1 = arith.constant 1 : i32
    %5 = arith.cmpi slt, %4, %c1_i32_1 : i32
    %6 = arith.extui %5 : i1 to i32
    %c0_i32_2 = arith.constant 0 : i32
    %7 = arith.cmpi ne, %6, %c0_i32_2 : i32
    scf.if %7 {
      %c0_i32_5 = arith.constant 0 : i32
      %c16_i32 = arith.constant 16 : i32
      %11 = arith.muli %c0_i32_5, %c16_i32 : i32
      %12 = tpu.assume_multiple %11, 16 : i32
      %13 = arith.index_cast %12 : i32 to index
      %c0 = arith.constant 0 : index
      %14 = vector.load %arg3[%13, %c0] : memref<16x128xf32, #tpu.memory_space<vmem>>, vector<16x128xf32>
      %15 = arith.index_cast %12 : i32 to index
      %c0_6 = arith.constant 0 : index
      %16 = vector.load %arg2[%15, %c0_6] : memref<16x128xf32, #tpu.memory_space<vmem>>, vector<16x128xf32>
      %17 = arith.subf %14, %16 : vector<16x128xf32>
      %c0_7 = arith.constant 0 : index
      %c0_8 = arith.constant 0 : index
      %18 = vector.load %arg5[%c0_7, %c0_8] : memref<16x128xf32, #tpu.memory_space<vmem>>, vector<16x128xf32>
      %19 = math.absf %17 : vector<16x128xf32>
      %cst = arith.constant -2.000000e+00 : f32
      %20 = vector.broadcast %cst : f32 to vector<16x128xf32>
      %21 = arith.mulf %20, %19 : vector<16x128xf32>
      %22 = math.exp %21 : vector<16x128xf32>
      %cst_9 = arith.constant 1.000000e+00 : f32
      %23 = vector.broadcast %cst_9 : f32 to vector<16x128xf32>
      %24 = arith.addf %23, %22 : vector<16x128xf32>
      %25 = math.log %24 : vector<16x128xf32>
      %26 = arith.addf %19, %25 : vector<16x128xf32>
      %cst_10 = arith.constant 0.693147182 : f32
      %27 = vector.broadcast %cst_10 : f32 to vector<16x128xf32>
      %28 = arith.subf %26, %27 : vector<16x128xf32>
      %29 = arith.addf %18, %28 : vector<16x128xf32>
      %c0_11 = arith.constant 0 : index
      %c0_12 = arith.constant 0 : index
      %30 = vector.load %arg5[%c0_11, %c0_12] : memref<16x128xf32, #tpu.memory_space<vmem>>, vector<16x128xf32>
      tpu.vector_store %arg5[%c0_11, %c0_12], %29 {strides = array<i32>} : memref<16x128xf32, #tpu.memory_space<vmem>>, vector<16x128xf32>,
      %c1_i32_13 = arith.constant 1 : i32
    } else {
    }
    %c0_i32_3 = arith.constant 0 : i32
    %8 = arith.cmpi eq, %arg1, %c0_i32_3 : i32
    %9 = arith.extui %8 : i1 to i32
    %c0_i32_4 = arith.constant 0 : i32
    %10 = arith.cmpi ne, %9, %c0_i32_4 : i32
    scf.if %10 {
      %c0 = arith.constant 0 : index
      %c0_5 = arith.constant 0 : index
      %11 = vector.load %arg5[%c0, %c0_5] : memref<16x128xf32, #tpu.memory_space<vmem>>, vector<16x128xf32>
      %12 = vector.shape_cast %11 : vector<16x128xf32> to vector<1x16x128xf32>
      %cst = arith.constant dense<0.000000e+00> : vector<1xf32>
      %13 = vector.multi_reduction <add>, %12, %cst [1, 2] : vector<1x16x128xf32> to vector<1xf32>
      %14 = vector.shape_cast %13 : vector<1xf32> to vector<1x1x1xf32>
      %15 = vector.extract %14[0, 0, 0] : f32 from vector<1x1x1xf32>
      %c0_6 = arith.constant 0 : index
      %c0_7 = arith.constant 0 : index
      %16 = memref.load %arg4[%c0_6, %c0_7] : memref<1x1xf32, #tpu.memory_space<smem>>
      memref.store %15, %arg4[%c0_6, %c0_7] : memref<1x1xf32, #tpu.memory_space<smem>>
    } else {
    }
    return
  }
  func.func @transform_0(%arg0: i32, %arg1: i32) -> (i32, i32) {
    %c1_i32 = arith.constant 1 : i32
    %0 = arith.muli %arg1, %c1_i32 : i32
    %1 = arith.addi %0, %arg0 : i32
    %c0_i32 = arith.constant 0 : i32
    %2 = arith.minsi %1, %c0_i32 : i32
    %c0_i32_0 = arith.constant 0 : i32
    %c0_i32_1 = arith.constant 0 : i32
    return %2, %c0_i32_0 : i32, i32
  }
  func.func @transform_1(%arg0: i32, %arg1: i32) -> (i32, i32) {
    %c1_i32 = arith.constant 1 : i32
    %0 = arith.muli %arg1, %c1_i32 : i32
    %1 = arith.addi %0, %arg0 : i32
    %c0_i32 = arith.constant 0 : i32
    %2 = arith.minsi %1, %c0_i32 : i32
    %c0_i32_0 = arith.constant 0 : i32
    %c0_i32_1 = arith.constant 0 : i32
    return %2, %c0_i32_0 : i32, i32
  }
  func.func @transform_2(%arg0: i32, %arg1: i32) -> (i32, i32) {
    %c0_i32 = arith.constant 0 : i32
    %c0_i32_0 = arith.constant 0 : i32
    return %arg0, %c0_i32 : i32, i32
  }
}

</mosaic_0001>

<llo_original>
// kernel: tpu_custom_call.1
$region0: #{tpu_custom_call.1}
  #allocation0 [shape = 'u32[]', space=smem, size = 0x4, offset = 0x4, fixed_abs, tag = 'smem constant byte address 0x4 - core index']
  #allocation1 [shape = 'u32[144,128]{1,0:T(1,128)}', space=vmem, size = 0x12000, scoped, tag = 'internal scratch']
  #allocation2 [shape = 'f32[16,128]{1,0:T(8,128)}', space=vmem, size = 0x2000, scoped, tag = 'scratch operand']
  %s0 = inlined_call_operand.hbm [shape: f32[16,128], index: 0, kind: input, shape index: {}]
  %s1 = inlined_call_operand.hbm [shape: f32[16,128], index: 1, kind: input, shape index: {}]
  %s2 = inlined_call_operand.hbm [shape: f32[1,1], index: 2, kind: output, shape index: {}]
  %s3 = sld [smem:[#allocation0]]
  $region38: #{tpu_custom_call.1} parent=0
    _
  %s5 = ssub.s32 1, %s3
  %s6 = scalar_select 0, %s5, %s3
  $region1: #{tpu_custom_call.1} parent=0
    #allocation3 [shape = 'u8[8192]{0}', space=vmem, size = 0x2000, scoped, tag = 'input window, operand 0, single buffered']
    #allocation4 [shape = 's32[1]{0}', space=sflag, size = 0x4, scoped, tag = 'scoped memory for tpu_custom_call.1']
    #allocation5 [shape = 's32[1]{0}', space=sflag, size = 0x4, scoped, tag = 'scoped memory for tpu_custom_call.1']
    #allocation6 [shape = 'u8[8192]{0}', space=vmem, size = 0x2000, scoped, tag = 'input window, operand 1, single buffered']
    #allocation7 [shape = 's32[1]{0}', space=sflag, size = 0x4, scoped, tag = 'scoped memory for tpu_custom_call.1']
    #allocation8 [shape = 'u8[512]{0}', space=smem, size = 0x200, scoped, tag = 'output window, operand 0, single buffered']
    %7 = vsyncpa [#allocation4], 0
    %8 = vsyncpa [#allocation7], 0
    %9 = vsyncpa [#allocation5], 0
    // Predicated region
    $region2: #{tpu_custom_call.1} parent=1 // pred_check
      _
    $region3: #{tpu_custom_call.1} parent=1 // pred_check_branch
      %11 = sbr.rel (0) target = $region5
    $region4: #{tpu_custom_call.1} parent=1 // pred_region
      %s12 = sadd.s32 0, 0
      %p13 = scmp.lt.s32.totalorder %s12, 0
      %s14 = scalar_select %p13, %s12, 0
      %s15 = smul.u32 2, %s14
      %s17 = ssub.s32 256, 256
      %18 = vsyncadd [#allocation4], %s17
      %s19 = smul.addr %s15, 128
      %s20 = scalar_lea.hbm %s0, %s19
      %s21 = sshll.u32 [#allocation3], 4
      %s22 = int_to_ptr.vmem [resolvable:$true] %s21
      %27 = dma.hbm_to_vmem [thread:$0]  %s20, 256, %s22, [#allocation4], 128, 128, 8
    $region5: #{tpu_custom_call.1} parent=1 // pred_fallthru
      _
    // Predicated region
    $region6: #{tpu_custom_call.1} parent=1 // pred_check
      _
    $region7: #{tpu_custom_call.1} parent=1 // pred_check_branch
      %29 = sbr.rel (0) target = $region9
    $region8: #{tpu_custom_call.1} parent=1 // pred_region
      %s30 = sadd.s32 0, 0
      %p31 = scmp.lt.s32.totalorder %s30, 0
      %s32 = scalar_select %p31, %s30, 0
      %s33 = smul.u32 2, %s32
      %s35 = ssub.s32 256, 256
      %36 = vsyncadd [#allocation7], %s35
      %s37 = smul.addr %s33, 128
      %s38 = scalar_lea.hbm %s1, %s37
      %s39 = sshll.u32 [#allocation6], 4
      %s40 = int_to_ptr.vmem [resolvable:$true] %s39
      %45 = dma.hbm_to_vmem [thread:$0]  %s38, 256, %s40, [#allocation7], 128, 128, 8
    $region9: #{tpu_custom_call.1} parent=1 // pred_fallthru
      _
    // Predicated region
    $region10: #{tpu_custom_call.1} parent=1 // pred_check
      _
    $region11: #{tpu_custom_call.1} parent=1 // pred_check_branch
      %47 = sbr.rel (0) target = $region13
    $region12: #{tpu_custom_call.1} parent=1 // pred_region
      %48 = dma.done [#allocation4], 256
    $region13: #{tpu_custom_call.1} parent=1 // pred_fallthru
      _
    // Predicated region
    $region14: #{tpu_custom_call.1} parent=1 // pred_check
      _
    $region15: #{tpu_custom_call.1} parent=1 // pred_check_branch
      %50 = sbr.rel (0) target = $region17
    $region16: #{tpu_custom_call.1} parent=1 // pred_region
      %51 = dma.done [#allocation7], 256
    $region17: #{tpu_custom_call.1} parent=1 // pred_fallthru
      _
    %s52 = sadd.s32 0, 0
    %p53 = scmp.lt.s32.totalorder %s52, 0
    %s54 = scalar_select %p53, %s52, 0
    %s55 = smul.u32 2, %s54
    %s56 = sadd.s32 0, 0
    %p57 = scmp.lt.s32.totalorder %s56, 0
    %s58 = scalar_select %p57, %s56, 0
    %s59 = smul.u32 2, %s58
    %p60 = scmp.eq.s32.totalorder 0, 0
    // Predicated region
    $region18: #{tpu_custom_call.1} parent=1 // pred_check
      %p61 = pneg %p60
    $region19: #{tpu_custom_call.1} parent=1 // pred_check_branch
      %63 = sbr.rel (%p61) target = $region21
    $region20: #{tpu_custom_call.1} parent=1 // pred_region
      %64 = vst [vmem:[#allocation2] sm:$0xff] 0.0
      %65 = vst [vmem:[#allocation2 + $0x8] sm:$0xff] 0.0
    $region21: #{tpu_custom_call.1} parent=1 // pred_fallthru
      _
    %s66 = sadd.s32 0, 0
    %p67 = scmp.lt.s32.totalorder %s66, 1
    // Predicated region
    $region22: #{tpu_custom_call.1} parent=1 // pred_check
      %p68 = pneg %p67
    $region23: #{tpu_custom_call.1} parent=1 // pred_check_branch
      %70 = sbr.rel (%p68) target = $region25
    $region24: #{tpu_custom_call.1} parent=1 // pred_region
      %v71 = vld [vmem:[#allocation6] sm:$0xff]
      %v72 = vld [vmem:[#allocation6 + $0x8] sm:$0xff]
      %v73 = vld [vmem:[#allocation3] sm:$0xff]
      %v74 = vld [vmem:[#allocation3 + $0x8] sm:$0xff]
      %v75 = vsub.f32 %v71, %v73
      %v76 = vsub.f32 %v72, %v74
      %v77 = vld [vmem:[#allocation2] sm:$0xff]
      %v78 = vld [vmem:[#allocation2 + $0x8] sm:$0xff]
      %v79 = vand.u32 2147483647, %v75
      %v80 = vand.u32 2147483647, %v76
      %v81 = vmul.f32 %v79, -2.0
      %v82 = vmul.f32 %v80, -2.0
      %v83 = vmul.f32 %v81, 1.442695
      %v84 = vpow.pop %v83
      %v85 = vmul.f32 %v82, 1.442695
      %v86 = vpow.pop %v85
      %v87 = vadd.f32 %v84, 1.0
      %v88 = vadd.f32 %v86, 1.0
      %v89 = vlog2.pop %v87
      %v90 = vmul.f32 %v89, 0.6931472
      %v91 = vlog2.pop %v88
      %v92 = vmul.f32 %v91, 0.6931472
      %v93 = vadd.f32 %v79, %v90
      %v94 = vadd.f32 %v80, %v92
      %v95 = vsub.f32 %v93, 0.6931472
      %v96 = vsub.f32 %v94, 0.6931472
      %v97 = vadd.f32 %v77, %v95
      %v98 = vadd.f32 %v78, %v96
      %99 = vst [vmem:[#allocation2] sm:$0xff] %v97
      %100 = vst [vmem:[#allocation2 + $0x8] sm:$0xff] %v98
    $region25: #{tpu_custom_call.1} parent=1 // pred_fallthru
      _
    // Predicated region
    $region26: #{tpu_custom_call.1} parent=1 // pred_check
      %p101 = pneg %p60
    $region27: #{tpu_custom_call.1} parent=1 // pred_check_branch
      %103 = sbr.rel (%p101) target = $region29
    $region28: #{tpu_custom_call.1} parent=1 // pred_region
      %v104 = vld [vmem:[#allocation2] sm:$0xff]
      %v105 = vld [vmem:[#allocation2 + $0x8] sm:$0xff]
      %v106 = vadd.f32 %v104, %v105
      %107 = vadd.xlane.f32.xlu0 %v106
      %v108 = vpop.xlane.xlu0 %107
      %v109 = vrot.slane %v108, 4
      %v110 = vadd.f32 %v108, %v109
      %v111 = vrot.slane %v110, 2
      %v112 = vadd.f32 %v110, %v111
      %v113 = vrot.slane %v112, 1
      %v114 = vadd.f32 %v112, %v113
      %s115 = vtos %v114
      %s116 = scalar_lea.smem [#allocation8], 0
      %117 = sst [smem:[%s116]] %s115
    $region29: #{tpu_custom_call.1} parent=1 // pred_fallthru
      _
    // Predicated region
    $region30: #{tpu_custom_call.1} parent=1 // pred_check
      _
    $region31: #{tpu_custom_call.1} parent=1 // pred_check_branch
      %119 = sbr.rel (0) target = $region33
    $region32: #{tpu_custom_call.1} parent=1 // pred_region
      %s121 = ssub.s32 16, 16
      %122 = vsyncadd [#allocation5], %s121
      %125 = dma.smem_to_hbm [#allocation8], 16, %s2, [#allocation5]
    $region33: #{tpu_custom_call.1} parent=1 // pred_fallthru
      _
    // Predicated region
    $region34: #{tpu_custom_call.1} parent=1 // pred_check
      _
    $region35: #{tpu_custom_call.1} parent=1 // pred_check_branch
      %127 = sbr.rel (0) target = $region37
    $region36: #{tpu_custom_call.1} parent=1 // pred_region
      %128 = dma.done [#allocation5], 16
    $region37: #{tpu_custom_call.1} parent=1 // pred_fallthru
      _
    %129 = sfence
    %130 = vsyncpa [#allocation4], 1
    %131 = vsyncpa [#allocation7], 1
    %132 = vsyncpa [#allocation5], 1

</llo_original>
